<compile_context>
chip_gen: v7x
topology: tpu7x:2x2x1
jax: 0.10.0
libtpu: 0.0.40
codegen_flags: <defaults>
</compile_context>

<pallas_src>
import functools

import jax
import jax.numpy as jnp
from jax.experimental import pallas as pl
from jax.experimental.pallas import tpu as pltpu


def _dice_partial_sums_kernel(logits_ref, labels_ref, inter_ref, denom_ref,
                              *, sub_rows):
    """Accumulate per-channel partial sums for dice.

    logits_ref: (C, TILE_ROWS, 128)  raw logits (any float dtype)
    labels_ref: (TILE_ROWS, 128)     integer class ids
    inter_ref:  (C, 8, 128) f32      sum of p * onehot(labels)
    denom_ref:  (C, 8, 128) f32      sum of p*p + onehot(labels)  (t*t == t)
    """
    mi = pl.program_id(2)

    @pl.when(mi == 0)
    def _():
        inter_ref[...] = jnp.zeros_like(inter_ref)
        denom_ref[...] = jnp.zeros_like(denom_ref)

    c, tile_rows, nl = logits_ref.shape
    n_sub = tile_rows // sub_rows
    folds = sub_rows // 8

    # Static loop over channels (C is small); vreg-granularity chunks inside
    # so no (C, TILE_ROWS, 128) intermediate is ever materialized in VMEM.
    for ch in range(c):

        def body(s, carry, ch=ch):
            i_acc, d_acc = carry
            r = pl.multiple_of(s * sub_rows, sub_rows)
            x = logits_ref[ch, pl.ds(r, sub_rows), :].astype(jnp.float32)
            lbl = labels_ref[pl.ds(r, sub_rows), :].astype(jnp.int32)
            # sigmoid with a single EUP op: sigmoid(x) = 0.5*tanh(x/2) + 0.5
            p = 0.5 * jnp.tanh(0.5 * x) + 0.5
            mask = lbl == ch
            psq = p * p
            i_chunk = jnp.where(mask, p, 0.0)            # p * t   (t one-hot)
            d_chunk = jnp.where(mask, psq + 1.0, psq)    # p*p + t*t
            # fold rows onto 8 sublanes with pure VPU adds (vreg-aligned split)
            i_acc = i_acc + jnp.sum(i_chunk.reshape(folds, 8, nl), axis=0)
            d_acc = d_acc + jnp.sum(d_chunk.reshape(folds, 8, nl), axis=0)
            return i_acc, d_acc

        zero = jnp.zeros((8, nl), jnp.float32)
        i_acc, d_acc = jax.lax.fori_loop(0, n_sub, body, (zero, zero),
                                         unroll=min(4, n_sub))
        inter_ref[ch] += i_acc
        denom_ref[ch] += d_acc


def _largest_tile(mr_split, align, cap):
    """Largest multiple of `align` that divides mr_split and is <= cap."""
    t = min(cap, mr_split)
    t -= t % align
    while t >= align and mr_split % t != 0:
        t -= align
    return max(t, align)


@jax.jit
def dice_loss_forward(logits, labels, weight=None):
    """Pallas implementation of DiceLoss.forward (sigmoid_norm=True).

    logits: (N, C, D, H, W) float (f32 or bf16 — streamed at its own width)
    labels: (N, D, H, W) integer (int8/uint8 kept narrow, others cast to i32)
    returns: (dice_loss scalar, per_channel_dice (C,))
    """
    if logits.ndim == 4:
        logits = logits[None]
    n, c, d, h, w = logits.shape
    m_per_n = d * h * w

    # TODO(synk): ragged spatial sizes (D*H*W not a multiple of 1024) would
    # need pl.cdiv + in-kernel masking; not required for this demo.
    assert m_per_n % 128 == 0 and (m_per_n // 128) % 8 == 0, \
        "D*H*W must be a multiple of 1024"
    mr = m_per_n // 128

    # Keep both HBM streams narrow — no wrapper-side upcast copies.
    if labels.dtype not in (jnp.int8, jnp.uint8, jnp.int32):
        labels = labels.astype(jnp.int32)

    # Sublane alignment implied by packed dtypes (32 / itemsize rows per vreg).
    def _align(itemsize):
        return 32 // itemsize
    row_align = max(8, _align(logits.dtype.itemsize),
                    _align(labels.dtype.itemsize))
    if mr % row_align:                 # pathological shapes: widen the streams
        labels = labels.astype(jnp.int32)
        logits = logits.astype(jnp.float32)
        row_align = 8

    # 2-way spatial split so both v7x TensorCores work even when N == 1.
    n_splits = 2 if mr % (2 * row_align) == 0 else 1
    mr_split = mr // n_splits

    # Derive tile size from chip VMEM (64 MiB/TC on v7x, 128 MiB on v5e/v6e):
    # double-buffered input tiles should use at most ~1/3 of it.
    try:
        vmem_capacity = pltpu.get_tpu_info().vmem_capacity_bytes
    except Exception:  # emulator / unknown chip: conservative default
        vmem_capacity = 64 * 1024 * 1024
    bytes_per_row = 128 * (c * logits.dtype.itemsize + labels.dtype.itemsize)
    cap_rows = max(row_align, (vmem_capacity // 3) // (2 * bytes_per_row))
    cap_rows = min(cap_rows, 4096)
    tile_rows = _largest_tile(mr_split, row_align, cap_rows)
    sub_rows = 32 if tile_rows % 32 == 0 else row_align
    num_m_tiles = mr_split // tile_rows

    vmem_limit = int(min(vmem_capacity,
                         max(2 * 2 * bytes_per_row * tile_rows + (8 << 20),
                             32 << 20)))

    # Pure reshapes of the natural layout — no HBM transpose / copy.
    logits_r = logits.reshape(n, c, mr, 128)
    labels_r = labels.reshape(n, mr, 128)

    grid = (n, n_splits, num_m_tiles)
    acc_shape = jax.ShapeDtypeStruct((n, n_splits, c, 8, 128), jnp.float32)
    acc_spec = pl.BlockSpec((None, None, c, 8, 128),
                            lambda i, s, mi: (i, s, 0, 0, 0))

    kernel = functools.partial(_dice_partial_sums_kernel, sub_rows=sub_rows)

    inter, denom = pl.pallas_call(
        kernel,
        out_shape=[acc_shape, acc_shape],
        grid_spec=pltpu.PrefetchScalarGridSpec(
            num_scalar_prefetch=0,
            grid=grid,
            in_specs=[
                pl.BlockSpec((None, c, tile_rows, 128),
                             lambda i, s, mi: (i, 0, s * num_m_tiles + mi, 0)),
                pl.BlockSpec((None, tile_rows, 128),
                             lambda i, s, mi: (i, s * num_m_tiles + mi, 0)),
            ],
            out_specs=[acc_spec, acc_spec],
        ),
        compiler_params=pltpu.CompilerParams(
            dimension_semantics=("parallel", "parallel", "arbitrary"),
            vmem_limit_bytes=vmem_limit,
        ),
    )(logits_r, labels_r)

    # Tiny epilogue in plain JAX: final cross-lane/sublane/batch/split reduce.
    intersect = jnp.sum(inter, axis=(0, 1, 3, 4))
    denominator = jnp.sum(denom, axis=(0, 1, 3, 4))
    if weight is not None:
        intersect = weight * intersect          # matches PyTorch module
    per_channel_dice = 2.0 * (intersect / jnp.maximum(denominator, 1e-06))
    dice_loss = 1.0 - jnp.mean(per_channel_dice)
    return dice_loss, per_channel_dice


def _reference(logits, labels):
    # pure-JAX reference mirroring the PyTorch module
    if logits.ndim == 4:
        logits = logits[None]
    c = logits.shape[1]
    one_hot = jax.nn.one_hot(labels.astype(jnp.int32), c, dtype=jnp.float32)
    one_hot = jnp.moveaxis(one_hot, -1, 1)
    p = jax.nn.sigmoid(logits.astype(jnp.float32))
    pf = jnp.transpose(p, (1, 0, 2, 3, 4)).reshape(c, -1)
    tf = jnp.transpose(one_hot, (1, 0, 2, 3, 4)).reshape(c, -1)
    inter = jnp.sum(pf * tf, axis=-1)
    denom = jnp.sum(pf * pf, axis=-1) + jnp.sum(tf * tf, axis=-1)
    dice = 2.0 * inter / jnp.maximum(denom, 1e-06)
    return 1.0 - jnp.mean(dice), dice


if __name__ == "__main__":
    key = jax.random.PRNGKey(0)
    k1, k2 = jax.random.split(key)

    N, C, D, H, W = 2, 4, 16, 16, 32       # D*H*W = 8192 -> 64 rows of 128 lanes
    logits = jax.random.normal(k1, (N, C, D, H, W), dtype=jnp.float32)
    labels = jax.random.randint(k2, (N, D, H, W), 0, C).astype(jnp.int8)

    loss, per_channel_dice = dice_loss_forward(logits, labels)
    jax.block_until_ready(loss)
    jax.block_until_ready(per_channel_dice)

    ref_loss, ref_dice = _reference(logits, labels)
    assert jnp.allclose(loss, ref_loss, atol=1e-5), (loss, ref_loss)
    assert jnp.allclose(per_channel_dice, ref_dice, atol=1e-5), (per_channel_dice, ref_dice)

    print("KERNEL_OK")
</pallas_src>

<mosaic_0001>
module attributes {stable_mosaic.version = 11 : i64} {
  func.func @_dice_partial_sums_kernel(%arg0: i32, %arg1: i32, %arg2: i32, %arg3: memref<1x4x32x128xf32, #tpu.memory_space<vmem>>, %arg4: memref<1x32x128xi8, #tpu.memory_space<vmem>>, %arg5: memref<1x1x4x8x128xf32, #tpu.memory_space<vmem>>, %arg6: memref<1x1x4x8x128xf32, #tpu.memory_space<vmem>>) attributes {dimension_semantics = [#tpu.dimension_semantics<parallel>, #tpu.dimension_semantics<parallel>, #tpu.dimension_semantics<arbitrary>], iteration_bounds = array<i64: 2, 2, 1>, scalar_prefetch = 0 : i64, scratch_operands = 0 : i64, tpu.core_type = #tpu.core_type<tc>, window_params = [{transform_indices = @transform_0, window_bounds = array<i64: 1, 4, 32, 128>}, {transform_indices = @transform_1, window_bounds = array<i64: 1, 32, 128>}, {transform_indices = @transform_2, window_bounds = array<i64: 1, 1, 4, 8, 128>}, {transform_indices = @transform_3, window_bounds = array<i64: 1, 1, 4, 8, 128>}]} {
    %c0_i32 = arith.constant 0 : i32
    %0 = arith.cmpi eq, %arg2, %c0_i32 : i32
    %1 = arith.extui %0 : i1 to i32
    %c0_i32_0 = arith.constant 0 : i32
    %2 = arith.cmpi ne, %1, %c0_i32_0 : i32
    scf.if %2 {
      %cst_140 = arith.constant 0.000000e+00 : f32
      %175 = vector.broadcast %cst_140 : f32 to vector<4x8x128xf32>
      %c0_141 = arith.constant 0 : index
      %c0_142 = arith.constant 0 : index
      %c0_143 = arith.constant 0 : index
      %c0_144 = arith.constant 0 : index
      %c0_145 = arith.constant 0 : index
      %176 = vector.load %arg5[%c0_141, %c0_142, %c0_143, %c0_144, %c0_145] : memref<1x1x4x8x128xf32, #tpu.memory_space<vmem>>, vector<1x1x4x8x128xf32>
      %177 = vector.shape_cast %176 : vector<1x1x4x8x128xf32> to vector<4x8x128xf32>
      %178 = vector.shape_cast %175 : vector<4x8x128xf32> to vector<1x1x4x8x128xf32>
      tpu.vector_store %arg5[%c0_141, %c0_142, %c0_143, %c0_144, %c0_145], %178 {strides = array<i32>} : memref<1x1x4x8x128xf32, #tpu.memory_space<vmem>>, vector<1x1x4x8x128xf32>,
      %cst_146 = arith.constant 0.000000e+00 : f32
      %179 = vector.broadcast %cst_146 : f32 to vector<4x8x128xf32>
      %c0_147 = arith.constant 0 : index
      %c0_148 = arith.constant 0 : index
      %c0_149 = arith.constant 0 : index
      %c0_150 = arith.constant 0 : index
      %c0_151 = arith.constant 0 : index
      %180 = vector.load %arg6[%c0_147, %c0_148, %c0_149, %c0_150, %c0_151] : memref<1x1x4x8x128xf32, #tpu.memory_space<vmem>>, vector<1x1x4x8x128xf32>
      %181 = vector.shape_cast %180 : vector<1x1x4x8x128xf32> to vector<4x8x128xf32>
      %182 = vector.shape_cast %179 : vector<4x8x128xf32> to vector<1x1x4x8x128xf32>
      tpu.vector_store %arg6[%c0_147, %c0_148, %c0_149, %c0_150, %c0_151], %182 {strides = array<i32>} : memref<1x1x4x8x128xf32, #tpu.memory_space<vmem>>, vector<1x1x4x8x128xf32>,
    } else {
    }
    %cst = arith.constant 0.000000e+00 : f32
    %3 = vector.broadcast %cst : f32 to vector<8x128xf32>
    %c0_i32_1 = arith.constant 0 : i32
    %c32_i32 = arith.constant 32 : i32
    %4 = arith.muli %c0_i32_1, %c32_i32 : i32
    %5 = tpu.assume_multiple %4, 32 : i32
    %c0 = arith.constant 0 : index
    %c0_2 = arith.constant 0 : index
    %6 = arith.index_cast %5 : i32 to index
    %c0_3 = arith.constant 0 : index
    %7 = vector.load %arg3[%c0, %c0_2, %6, %c0_3] : memref<1x4x32x128xf32, #tpu.memory_space<vmem>>, vector<1x1x32x128xf32>
    %8 = vector.shape_cast %7 : vector<1x1x32x128xf32> to vector<32x128xf32>
    %c0_4 = arith.constant 0 : index
    %9 = arith.index_cast %5 : i32 to index
    %c0_5 = arith.constant 0 : index
    %10 = vector.load %arg4[%c0_4, %9, %c0_5] : memref<1x32x128xi8, #tpu.memory_space<vmem>>, vector<1x32x128xi8>
    %11 = vector.shape_cast %10 : vector<1x32x128xi8> to vector<32x128xi8>
    %12 = arith.extsi %11 : vector<32x128xi8> to vector<32x128xi32>
    %cst_6 = arith.constant 5.000000e-01 : f32
    %13 = vector.broadcast %cst_6 : f32 to vector<32x128xf32>
    %14 = arith.mulf %13, %8 : vector<32x128xf32>
    %15 = math.tanh %14 : vector<32x128xf32>
    %cst_7 = arith.constant 5.000000e-01 : f32
    %16 = vector.broadcast %cst_7 : f32 to vector<32x128xf32>
    %17 = arith.mulf %16, %15 : vector<32x128xf32>
    %cst_8 = arith.constant 5.000000e-01 : f32
    %18 = vector.broadcast %cst_8 : f32 to vector<32x128xf32>
    %19 = arith.addf %17, %18 : vector<32x128xf32>
    %c0_i32_9 = arith.constant 0 : i32
    %20 = vector.broadcast %c0_i32_9 : i32 to vector<32x128xi32>
    %21 = arith.cmpi eq, %12, %20 : vector<32x128xi32>
    %22 = arith.mulf %19, %19 : vector<32x128xf32>
    %cst_10 = arith.constant 0.000000e+00 : f32
    %23 = vector.broadcast %cst_10 : f32 to vector<32x128xf32>
    %24 = arith.select %21, %19, %23 : vector<32x128xi1>, vector<32x128xf32>
    %cst_11 = arith.constant 1.000000e+00 : f32
    %25 = vector.broadcast %cst_11 : f32 to vector<32x128xf32>
    %26 = arith.addf %22, %25 : vector<32x128xf32>
    %27 = arith.select %21, %26, %22 : vector<32x128xi1>, vector<32x128xf32>
    %28 = vector.shape_cast %24 : vector<32x128xf32> to vector<4x8x128xf32>
    %cst_12 = arith.constant dense<0.000000e+00> : vector<8x128xf32>
    %29 = vector.multi_reduction <add>, %28, %cst_12 [0] : vector<4x8x128xf32> to vector<8x128xf32>
    %30 = arith.addf %3, %29 : vector<8x128xf32>
    %31 = vector.shape_cast %27 : vector<32x128xf32> to vector<4x8x128xf32>
    %cst_13 = arith.constant dense<0.000000e+00> : vector<8x128xf32>
    %32 = vector.multi_reduction <add>, %31, %cst_13 [0] : vector<4x8x128xf32> to vector<8x128xf32>
    %33 = arith.addf %3, %32 : vector<8x128xf32>
    %c1_i32 = arith.constant 1 : i32
    %c0_14 = arith.constant 0 : index
    %c0_15 = arith.constant 0 : index
    %c0_16 = arith.constant 0 : index
    %c0_17 = arith.constant 0 : index
    %c0_18 = arith.constant 0 : index
    %34 = vector.load %arg5[%c0_14, %c0_15, %c0_16, %c0_17, %c0_18] : memref<1x1x4x8x128xf32, #tpu.memory_space<vmem>>, vector<1x1x1x8x128xf32>
    %35 = vector.shape_cast %34 : vector<1x1x1x8x128xf32> to vector<8x128xf32>
    %36 = arith.addf %35, %30 : vector<8x128xf32>
    %c0_19 = arith.constant 0 : index
    %c0_20 = arith.constant 0 : index
    %c0_21 = arith.constant 0 : index
    %c0_22 = arith.constant 0 : index
    %c0_23 = arith.constant 0 : index
    %37 = vector.load %arg5[%c0_19, %c0_20, %c0_21, %c0_22, %c0_23] : memref<1x1x4x8x128xf32, #tpu.memory_space<vmem>>, vector<1x1x1x8x128xf32>
    %38 = vector.shape_cast %37 : vector<1x1x1x8x128xf32> to vector<8x128xf32>
    %39 = vector.shape_cast %36 : vector<8x128xf32> to vector<1x1x1x8x128xf32>
    tpu.vector_store %arg5[%c0_19, %c0_20, %c0_21, %c0_22, %c0_23], %39 {strides = array<i32>} : memref<1x1x4x8x128xf32, #tpu.memory_space<vmem>>, vector<1x1x1x8x128xf32>,
    %c0_24 = arith.constant 0 : index
    %c0_25 = arith.constant 0 : index
    %c0_26 = arith.constant 0 : index
    %c0_27 = arith.constant 0 : index
    %c0_28 = arith.constant 0 : index
    %40 = vector.load %arg6[%c0_24, %c0_25, %c0_26, %c0_27, %c0_28] : memref<1x1x4x8x128xf32, #tpu.memory_space<vmem>>, vector<1x1x1x8x128xf32>
    %41 = vector.shape_cast %40 : vector<1x1x1x8x128xf32> to vector<8x128xf32>
    %42 = arith.addf %41, %33 : vector<8x128xf32>
    %c0_29 = arith.constant 0 : index
    %c0_30 = arith.constant 0 : index
    %c0_31 = arith.constant 0 : index
    %c0_32 = arith.constant 0 : index
    %c0_33 = arith.constant 0 : index
    %43 = vector.load %arg6[%c0_29, %c0_30, %c0_31, %c0_32, %c0_33] : memref<1x1x4x8x128xf32, #tpu.memory_space<vmem>>, vector<1x1x1x8x128xf32>
    %44 = vector.shape_cast %43 : vector<1x1x1x8x128xf32> to vector<8x128xf32>
    %45 = vector.shape_cast %42 : vector<8x128xf32> to vector<1x1x1x8x128xf32>
    tpu.vector_store %arg6[%c0_29, %c0_30, %c0_31, %c0_32, %c0_33], %45 {strides = array<i32>} : memref<1x1x4x8x128xf32, #tpu.memory_space<vmem>>, vector<1x1x1x8x128xf32>,
    %cst_34 = arith.constant 0.000000e+00 : f32
    %46 = vector.broadcast %cst_34 : f32 to vector<8x128xf32>
    %c0_i32_35 = arith.constant 0 : i32
    %c32_i32_36 = arith.constant 32 : i32
    %47 = arith.muli %c0_i32_35, %c32_i32_36 : i32
    %48 = tpu.assume_multiple %47, 32 : i32
    %c0_37 = arith.constant 0 : index
    %c1 = arith.constant 1 : index
    %49 = arith.index_cast %48 : i32 to index
    %c0_38 = arith.constant 0 : index
    %50 = vector.load %arg3[%c0_37, %c1, %49, %c0_38] : memref<1x4x32x128xf32, #tpu.memory_space<vmem>>, vector<1x1x32x128xf32>
    %51 = vector.shape_cast %50 : vector<1x1x32x128xf32> to vector<32x128xf32>
    %c0_39 = arith.constant 0 : index
    %52 = arith.index_cast %48 : i32 to index
    %c0_40 = arith.constant 0 : index
    %53 = vector.load %arg4[%c0_39, %52, %c0_40] : memref<1x32x128xi8, #tpu.memory_space<vmem>>, vector<1x32x128xi8>
    %54 = vector.shape_cast %53 : vector<1x32x128xi8> to vector<32x128xi8>
    %55 = arith.extsi %54 : vector<32x128xi8> to vector<32x128xi32>
    %cst_41 = arith.constant 5.000000e-01 : f32
    %56 = vector.broadcast %cst_41 : f32 to vector<32x128xf32>
    %57 = arith.mulf %56, %51 : vector<32x128xf32>
    %58 = math.tanh %57 : vector<32x128xf32>
    %cst_42 = arith.constant 5.000000e-01 : f32
    %59 = vector.broadcast %cst_42 : f32 to vector<32x128xf32>
    %60 = arith.mulf %59, %58 : vector<32x128xf32>
    %cst_43 = arith.constant 5.000000e-01 : f32
    %61 = vector.broadcast %cst_43 : f32 to vector<32x128xf32>
    %62 = arith.addf %60, %61 : vector<32x128xf32>
    %c1_i32_44 = arith.constant 1 : i32
    %63 = vector.broadcast %c1_i32_44 : i32 to vector<32x128xi32>
    %64 = arith.cmpi eq, %55, %63 : vector<32x128xi32>
    %65 = arith.mulf %62, %62 : vector<32x128xf32>
    %cst_45 = arith.constant 0.000000e+00 : f32
    %66 = vector.broadcast %cst_45 : f32 to vector<32x128xf32>
    %67 = arith.select %64, %62, %66 : vector<32x128xi1>, vector<32x128xf32>
    %cst_46 = arith.constant 1.000000e+00 : f32
    %68 = vector.broadcast %cst_46 : f32 to vector<32x128xf32>
    %69 = arith.addf %65, %68 : vector<32x128xf32>
    %70 = arith.select %64, %69, %65 : vector<32x128xi1>, vector<32x128xf32>
    %71 = vector.shape_cast %67 : vector<32x128xf32> to vector<4x8x128xf32>
    %cst_47 = arith.constant dense<0.000000e+00> : vector<8x128xf32>
    %72 = vector.multi_reduction <add>, %71, %cst_47 [0] : vector<4x8x128xf32> to vector<8x128xf32>
    %73 = arith.addf %46, %72 : vector<8x128xf32>
    %74 = vector.shape_cast %70 : vector<32x128xf32> to vector<4x8x128xf32>
    %cst_48 = arith.constant dense<0.000000e+00> : vector<8x128xf32>
    %75 = vector.multi_reduction <add>, %74, %cst_48 [0] : vector<4x8x128xf32> to vector<8x128xf32>
    %76 = arith.addf %46, %75 : vector<8x128xf32>
    %c1_i32_49 = arith.constant 1 : i32
    %c0_50 = arith.constant 0 : index
    %c0_51 = arith.constant 0 : index
    %c1_52 = arith.constant 1 : index
    %c0_53 = arith.constant 0 : index
    %c0_54 = arith.constant 0 : index
    %77 = vector.load %arg5[%c0_50, %c0_51, %c1_52, %c0_53, %c0_54] : memref<1x1x4x8x128xf32, #tpu.memory_space<vmem>>, vector<1x1x1x8x128xf32>
    %78 = vector.shape_cast %77 : vector<1x1x1x8x128xf32> to vector<8x128xf32>
    %79 = arith.addf %78, %73 : vector<8x128xf32>
    %c0_55 = arith.constant 0 : index
    %c0_56 = arith.constant 0 : index
    %c1_57 = arith.constant 1 : index
    %c0_58 = arith.constant 0 : index
    %c0_59 = arith.constant 0 : index
    %80 = vector.load %arg5[%c0_55, %c0_56, %c1_57, %c0_58, %c0_59] : memref<1x1x4x8x128xf32, #tpu.memory_space<vmem>>, vector<1x1x1x8x128xf32>
    %81 = vector.shape_cast %80 : vector<1x1x1x8x128xf32> to vector<8x128xf32>
    %82 = vector.shape_cast %79 : vector<8x128xf32> to vector<1x1x1x8x128xf32>
    tpu.vector_store %arg5[%c0_55, %c0_56, %c1_57, %c0_58, %c0_59], %82 {strides = array<i32>} : memref<1x1x4x8x128xf32, #tpu.memory_space<vmem>>, vector<1x1x1x8x128xf32>,
    %c0_60 = arith.constant 0 : index
    %c0_61 = arith.constant 0 : index
    %c1_62 = arith.constant 1 : index
    %c0_63 = arith.constant 0 : index
    %c0_64 = arith.constant 0 : index
    %83 = vector.load %arg6[%c0_60, %c0_61, %c1_62, %c0_63, %c0_64] : memref<1x1x4x8x128xf32, #tpu.memory_space<vmem>>, vector<1x1x1x8x128xf32>
    %84 = vector.shape_cast %83 : vector<1x1x1x8x128xf32> to vector<8x128xf32>
    %85 = arith.addf %84, %76 : vector<8x128xf32>
    %c0_65 = arith.constant 0 : index
    %c0_66 = arith.constant 0 : index
    %c1_67 = arith.constant 1 : index
    %c0_68 = arith.constant 0 : index
    %c0_69 = arith.constant 0 : index
    %86 = vector.load %arg6[%c0_65, %c0_66, %c1_67, %c0_68, %c0_69] : memref<1x1x4x8x128xf32, #tpu.memory_space<vmem>>, vector<1x1x1x8x128xf32>
    %87 = vector.shape_cast %86 : vector<1x1x1x8x128xf32> to vector<8x128xf32>
    %88 = vector.shape_cast %85 : vector<8x128xf32> to vector<1x1x1x8x128xf32>
    tpu.vector_store %arg6[%c0_65, %c0_66, %c1_67, %c0_68, %c0_69], %88 {strides = array<i32>} : memref<1x1x4x8x128xf32, #tpu.memory_space<vmem>>, vector<1x1x1x8x128xf32>,
    %cst_70 = arith.constant 0.000000e+00 : f32
    %89 = vector.broadcast %cst_70 : f32 to vector<8x128xf32>
    %c0_i32_71 = arith.constant 0 : i32
    %c32_i32_72 = arith.constant 32 : i32
    %90 = arith.muli %c0_i32_71, %c32_i32_72 : i32
    %91 = tpu.assume_multiple %90, 32 : i32
    %c0_73 = arith.constant 0 : index
    %c2 = arith.constant 2 : index
    %92 = arith.index_cast %91 : i32 to index
    %c0_74 = arith.constant 0 : index
    %93 = vector.load %arg3[%c0_73, %c2, %92, %c0_74] : memref<1x4x32x128xf32, #tpu.memory_space<vmem>>, vector<1x1x32x128xf32>
    %94 = vector.shape_cast %93 : vector<1x1x32x128xf32> to vector<32x128xf32>
    %c0_75 = arith.constant 0 : index
    %95 = arith.index_cast %91 : i32 to index
    %c0_76 = arith.constant 0 : index
    %96 = vector.load %arg4[%c0_75, %95, %c0_76] : memref<1x32x128xi8, #tpu.memory_space<vmem>>, vector<1x32x128xi8>
    %97 = vector.shape_cast %96 : vector<1x32x128xi8> to vector<32x128xi8>
    %98 = arith.extsi %97 : vector<32x128xi8> to vector<32x128xi32>
    %cst_77 = arith.constant 5.000000e-01 : f32
    %99 = vector.broadcast %cst_77 : f32 to vector<32x128xf32>
    %100 = arith.mulf %99, %94 : vector<32x128xf32>
    %101 = math.tanh %100 : vector<32x128xf32>
    %cst_78 = arith.constant 5.000000e-01 : f32
    %102 = vector.broadcast %cst_78 : f32 to vector<32x128xf32>
    %103 = arith.mulf %102, %101 : vector<32x128xf32>
    %cst_79 = arith.constant 5.000000e-01 : f32
    %104 = vector.broadcast %cst_79 : f32 to vector<32x128xf32>
    %105 = arith.addf %103, %104 : vector<32x128xf32>
    %c2_i32 = arith.constant 2 : i32
    %106 = vector.broadcast %c2_i32 : i32 to vector<32x128xi32>
    %107 = arith.cmpi eq, %98, %106 : vector<32x128xi32>
    %108 = arith.mulf %105, %105 : vector<32x128xf32>
    %cst_80 = arith.constant 0.000000e+00 : f32
    %109 = vector.broadcast %cst_80 : f32 to vector<32x128xf32>
    %110 = arith.select %107, %105, %109 : vector<32x128xi1>, vector<32x128xf32>
    %cst_81 = arith.constant 1.000000e+00 : f32
    %111 = vector.broadcast %cst_81 : f32 to vector<32x128xf32>
    %112 = arith.addf %108, %111 : vector<32x128xf32>
    %113 = arith.select %107, %112, %108 : vector<32x128xi1>, vector<32x128xf32>
    %114 = vector.shape_cast %110 : vector<32x128xf32> to vector<4x8x128xf32>
    %cst_82 = arith.constant dense<0.000000e+00> : vector<8x128xf32>
    %115 = vector.multi_reduction <add>, %114, %cst_82 [0] : vector<4x8x128xf32> to vector<8x128xf32>
    %116 = arith.addf %89, %115 : vector<8x128xf32>
    %117 = vector.shape_cast %113 : vector<32x128xf32> to vector<4x8x128xf32>
    %cst_83 = arith.constant dense<0.000000e+00> : vector<8x128xf32>
    %118 = vector.multi_reduction <add>, %117, %cst_83 [0] : vector<4x8x128xf32> to vector<8x128xf32>
    %119 = arith.addf %89, %118 : vector<8x128xf32>
    %c1_i32_84 = arith.constant 1 : i32
    %c0_85 = arith.constant 0 : index
    %c0_86 = arith.constant 0 : index
    %c2_87 = arith.constant 2 : index
    %c0_88 = arith.constant 0 : index
    %c0_89 = arith.constant 0 : index
    %120 = vector.load %arg5[%c0_85, %c0_86, %c2_87, %c0_88, %c0_89] : memref<1x1x4x8x128xf32, #tpu.memory_space<vmem>>, vector<1x1x1x8x128xf32>
    %121 = vector.shape_cast %120 : vector<1x1x1x8x128xf32> to vector<8x128xf32>
    %122 = arith.addf %121, %116 : vector<8x128xf32>
    %c0_90 = arith.constant 0 : index
    %c0_91 = arith.constant 0 : index
    %c2_92 = arith.constant 2 : index
    %c0_93 = arith.constant 0 : index
    %c0_94 = arith.constant 0 : index
    %123 = vector.load %arg5[%c0_90, %c0_91, %c2_92, %c0_93, %c0_94] : memref<1x1x4x8x128xf32, #tpu.memory_space<vmem>>, vector<1x1x1x8x128xf32>
    %124 = vector.shape_cast %123 : vector<1x1x1x8x128xf32> to vector<8x128xf32>
    %125 = vector.shape_cast %122 : vector<8x128xf32> to vector<1x1x1x8x128xf32>
    tpu.vector_store %arg5[%c0_90, %c0_91, %c2_92, %c0_93, %c0_94], %125 {strides = array<i32>} : memref<1x1x4x8x128xf32, #tpu.memory_space<vmem>>, vector<1x1x1x8x128xf32>,
    %c0_95 = arith.constant 0 : index
    %c0_96 = arith.constant 0 : index
    %c2_97 = arith.constant 2 : index
    %c0_98 = arith.constant 0 : index
    %c0_99 = arith.constant 0 : index
    %126 = vector.load %arg6[%c0_95, %c0_96, %c2_97, %c0_98, %c0_99] : memref<1x1x4x8x128xf32, #tpu.memory_space<vmem>>, vector<1x1x1x8x128xf32>
    %127 = vector.shape_cast %126 : vector<1x1x1x8x128xf32> to vector<8x128xf32>
    %128 = arith.addf %127, %119 : vector<8x128xf32>
    %c0_100 = arith.constant 0 : index
    %c0_101 = arith.constant 0 : index
    %c2_102 = arith.constant 2 : index
    %c0_103 = arith.constant 0 : index
    %c0_104 = arith.constant 0 : index
    %129 = vector.load %arg6[%c0_100, %c0_101, %c2_102, %c0_103, %c0_104] : memref<1x1x4x8x128xf32, #tpu.memory_space<vmem>>, vector<1x1x1x8x128xf32>
    %130 = vector.shape_cast %129 : vector<1x1x1x8x128xf32> to vector<8x128xf32>
    %131 = vector.shape_cast %128 : vector<8x128xf32> to vector<1x1x1x8x128xf32>
    tpu.vector_store %arg6[%c0_100, %c0_101, %c2_102, %c0_103, %c0_104], %131 {strides = array<i32>} : memref<1x1x4x8x128xf32, #tpu.memory_space<vmem>>, vector<1x1x1x8x128xf32>,
    %cst_105 = arith.constant 0.000000e+00 : f32
    %132 = vector.broadcast %cst_105 : f32 to vector<8x128xf32>
    %c0_i32_106 = arith.constant 0 : i32
    %c32_i32_107 = arith.constant 32 : i32
    %133 = arith.muli %c0_i32_106, %c32_i32_107 : i32
    %134 = tpu.assume_multiple %133, 32 : i32
    %c0_108 = arith.constant 0 : index
    %c3 = arith.constant 3 : index
    %135 = arith.index_cast %134 : i32 to index
    %c0_109 = arith.constant 0 : index
    %136 = vector.load %arg3[%c0_108, %c3, %135, %c0_109] : memref<1x4x32x128xf32, #tpu.memory_space<vmem>>, vector<1x1x32x128xf32>
    %137 = vector.shape_cast %136 : vector<1x1x32x128xf32> to vector<32x128xf32>
    %c0_110 = arith.constant 0 : index
    %138 = arith.index_cast %134 : i32 to index
    %c0_111 = arith.constant 0 : index
    %139 = vector.load %arg4[%c0_110, %138, %c0_111] : memref<1x32x128xi8, #tpu.memory_space<vmem>>, vector<1x32x128xi8>
    %140 = vector.shape_cast %139 : vector<1x32x128xi8> to vector<32x128xi8>
    %141 = arith.extsi %140 : vector<32x128xi8> to vector<32x128xi32>
    %cst_112 = arith.constant 5.000000e-01 : f32
    %142 = vector.broadcast %cst_112 : f32 to vector<32x128xf32>
    %143 = arith.mulf %142, %137 : vector<32x128xf32>
    %144 = math.tanh %143 : vector<32x128xf32>
    %cst_113 = arith.constant 5.000000e-01 : f32
    %145 = vector.broadcast %cst_113 : f32 to vector<32x128xf32>
    %146 = arith.mulf %145, %144 : vector<32x128xf32>
    %cst_114 = arith.constant 5.000000e-01 : f32
    %147 = vector.broadcast %cst_114 : f32 to vector<32x128xf32>
    %148 = arith.addf %146, %147 : vector<32x128xf32>
    %c3_i32 = arith.constant 3 : i32
    %149 = vector.broadcast %c3_i32 : i32 to vector<32x128xi32>
    %150 = arith.cmpi eq, %141, %149 : vector<32x128xi32>
    %151 = arith.mulf %148, %148 : vector<32x128xf32>
    %cst_115 = arith.constant 0.000000e+00 : f32
    %152 = vector.broadcast %cst_115 : f32 to vector<32x128xf32>
    %153 = arith.select %150, %148, %152 : vector<32x128xi1>, vector<32x128xf32>
    %cst_116 = arith.constant 1.000000e+00 : f32
    %154 = vector.broadcast %cst_116 : f32 to vector<32x128xf32>
    %155 = arith.addf %151, %154 : vector<32x128xf32>
    %156 = arith.select %150, %155, %151 : vector<32x128xi1>, vector<32x128xf32>
    %157 = vector.shape_cast %153 : vector<32x128xf32> to vector<4x8x128xf32>
    %cst_117 = arith.constant dense<0.000000e+00> : vector<8x128xf32>
    %158 = vector.multi_reduction <add>, %157, %cst_117 [0] : vector<4x8x128xf32> to vector<8x128xf32>
    %159 = arith.addf %132, %158 : vector<8x128xf32>
    %160 = vector.shape_cast %156 : vector<32x128xf32> to vector<4x8x128xf32>
    %cst_118 = arith.constant dense<0.000000e+00> : vector<8x128xf32>
    %161 = vector.multi_reduction <add>, %160, %cst_118 [0] : vector<4x8x128xf32> to vector<8x128xf32>
    %162 = arith.addf %132, %161 : vector<8x128xf32>
    %c1_i32_119 = arith.constant 1 : i32
    %c0_120 = arith.constant 0 : index
    %c0_121 = arith.constant 0 : index
    %c3_122 = arith.constant 3 : index
    %c0_123 = arith.constant 0 : index
    %c0_124 = arith.constant 0 : index
    %163 = vector.load %arg5[%c0_120, %c0_121, %c3_122, %c0_123, %c0_124] : memref<1x1x4x8x128xf32, #tpu.memory_space<vmem>>, vector<1x1x1x8x128xf32>
    %164 = vector.shape_cast %163 : vector<1x1x1x8x128xf32> to vector<8x128xf32>
    %165 = arith.addf %164, %159 : vector<8x128xf32>
    %c0_125 = arith.constant 0 : index
    %c0_126 = arith.constant 0 : index
    %c3_127 = arith.constant 3 : index
    %c0_128 = arith.constant 0 : index
    %c0_129 = arith.constant 0 : index
    %166 = vector.load %arg5[%c0_125, %c0_126, %c3_127, %c0_128, %c0_129] : memref<1x1x4x8x128xf32, #tpu.memory_space<vmem>>, vector<1x1x1x8x128xf32>
    %167 = vector.shape_cast %166 : vector<1x1x1x8x128xf32> to vector<8x128xf32>
    %168 = vector.shape_cast %165 : vector<8x128xf32> to vector<1x1x1x8x128xf32>
    tpu.vector_store %arg5[%c0_125, %c0_126, %c3_127, %c0_128, %c0_129], %168 {strides = array<i32>} : memref<1x1x4x8x128xf32, #tpu.memory_space<vmem>>, vector<1x1x1x8x128xf32>,
    %c0_130 = arith.constant 0 : index
    %c0_131 = arith.constant 0 : index
    %c3_132 = arith.constant 3 : index
    %c0_133 = arith.constant 0 : index
    %c0_134 = arith.constant 0 : index
    %169 = vector.load %arg6[%c0_130, %c0_131, %c3_132, %c0_133, %c0_134] : memref<1x1x4x8x128xf32, #tpu.memory_space<vmem>>, vector<1x1x1x8x128xf32>
    %170 = vector.shape_cast %169 : vector<1x1x1x8x128xf32> to vector<8x128xf32>
    %171 = arith.addf %170, %162 : vector<8x128xf32>
    %c0_135 = arith.constant 0 : index
    %c0_136 = arith.constant 0 : index
    %c3_137 = arith.constant 3 : index
    %c0_138 = arith.constant 0 : index
    %c0_139 = arith.constant 0 : index
    %172 = vector.load %arg6[%c0_135, %c0_136, %c3_137, %c0_138, %c0_139] : memref<1x1x4x8x128xf32, #tpu.memory_space<vmem>>, vector<1x1x1x8x128xf32>
    %173 = vector.shape_cast %172 : vector<1x1x1x8x128xf32> to vector<8x128xf32>
    %174 = vector.shape_cast %171 : vector<8x128xf32> to vector<1x1x1x8x128xf32>
    tpu.vector_store %arg6[%c0_135, %c0_136, %c3_137, %c0_138, %c0_139], %174 {strides = array<i32>} : memref<1x1x4x8x128xf32, #tpu.memory_space<vmem>>, vector<1x1x1x8x128xf32>,
    return
  }
  func.func @transform_0(%arg0: i32, %arg1: i32, %arg2: i32) -> (i32, i32, i32, i32) {
    %c1_i32 = arith.constant 1 : i32
    %0 = arith.muli %arg1, %c1_i32 : i32
    %1 = arith.addi %0, %arg2 : i32
    %c0_i32 = arith.constant 0 : i32
    %c0_i32_0 = arith.constant 0 : i32
    %c0_i32_1 = arith.constant 0 : i32
    return %arg0, %c0_i32, %1, %c0_i32_0 : i32, i32, i32, i32
  }
  func.func @transform_1(%arg0: i32, %arg1: i32, %arg2: i32) -> (i32, i32, i32) {
    %c1_i32 = arith.constant 1 : i32
    %0 = arith.muli %arg1, %c1_i32 : i32
    %1 = arith.addi %0, %arg2 : i32
    %c0_i32 = arith.constant 0 : i32
    %c0_i32_0 = arith.constant 0 : i32
    return %arg0, %1, %c0_i32 : i32, i32, i32
  }
  func.func @transform_2(%arg0: i32, %arg1: i32, %arg2: i32) -> (i32, i32, i32, i32, i32) {
    %c0_i32 = arith.constant 0 : i32
    %c0_i32_0 = arith.constant 0 : i32
    %c0_i32_1 = arith.constant 0 : i32
    %c0_i32_2 = arith.constant 0 : i32
    return %arg0, %arg1, %c0_i32, %c0_i32_0, %c0_i32_1 : i32, i32, i32, i32, i32
  }
  func.func @transform_3(%arg0: i32, %arg1: i32, %arg2: i32) -> (i32, i32, i32, i32, i32) {
    %c0_i32 = arith.constant 0 : i32
    %c0_i32_0 = arith.constant 0 : i32
    %c0_i32_1 = arith.constant 0 : i32
    %c0_i32_2 = arith.constant 0 : i32
    return %arg0, %arg1, %c0_i32, %c0_i32_0, %c0_i32_1 : i32, i32, i32, i32, i32
  }
}

</mosaic_0001>

<llo_original>
// kernel: dice_loss_forward.1
$region0: #{dice_loss_forward.1}
  #allocation0 [shape = 'u32[]', space=smem, size = 0x4, offset = 0x4, fixed_abs, tag = 'smem constant byte address 0x4 - core index']
  #allocation1 [shape = 'u32[144,128]{1,0:T(1,128)}', space=vmem, size = 0x12000, scoped, tag = 'internal scratch']
  %s0 = inlined_call_operand.vmem [shape: f32[2,4,64,128], index: 0, kind: input, shape index: {}]
  %s1 = inlined_call_operand.vmem [shape: s8[2,64,128], index: 1, kind: input, shape index: {}]
  %s2 = inlined_call_operand.vmem [shape: f32[2,2,4,8,128], index: 2, kind: output, shape index: {0}]
  %s3 = inlined_call_operand.vmem [shape: f32[2,2,4,8,128], index: 3, kind: output, shape index: {1}]
  %4 = xla_tuple %s2, %s3
  %s5 = sld [smem:[#allocation0]]
  $region91: #{dice_loss_forward.1} parent=0
    _
  %s7 = ssub.s32 1, %s5
  %s8 = scalar_select 0, %s7, %s5
  $region1: #{dice_loss_forward.1} parent=0
    #allocation2 [shape = 'u8[131072]{0}', space=vmem, size = 0x20000, scoped, tag = 'input window, operand 0']
    loop: start=0, step=1, limit=6
    $region2: #{dice_loss_forward.1} parent=1 // loop_pre_header
      _
    $region3: #{dice_loss_forward.1} parent=1 // loop_header
      %s10 = sphi 0, %s14
      %p11 = scmp.ge.s32.totalorder %s10, 6
      %s17 = sphi 0, %s36
      %s18 = sphi 0, %s32
      %s19 = sphi 0, %s28
      %s20 = sphi 0, %s17
      %s21 = sphi 0, %s18
      %s22 = sphi 0, %s19
      %s23 = sphi 0, %s20
      %s24 = sphi 0, %s21
      %s25 = sphi 0, %s22
      %s43 = sphi 0, %s45
      %s46 = sphi 0, %s43
      %s47 = sphi 0, %s46
      %s63 = sphi 0, %s47
      %s73 = sphi 0, %s75
      %s76 = sphi 0, %s73
      %s77 = sphi 0, %s76
      %s93 = sphi 0, %s77
      %s101 = sphi 0, %s103
      %s104 = sphi 0, %s101
      %s105 = sphi 0, %s104
      %s121 = sphi 0, %s105
      %s129 = sphi 0, %s131
      %s132 = sphi 0, %s129
      %s133 = sphi 0, %s132
      %s149 = sphi 0, %s133
    $region4: #{dice_loss_forward.1} parent=1 // loop_header_branch
      %13 = sbr.rel (%p11) target = $region8
    $region5: #{dice_loss_forward.1} parent=1 // loop_body
      %s15 = ssub.s32 %s10, 1
      %s16 = ssub.s32 %s10, 2
      %s26 = sadd.s32 1, %s19
      %p27 = scmp.ge.s32.totalorder %s26, 1
      %s28 = scalar_select %p27, 0, %s26
      %s29 = sadd.s32 1, %s18
      %s30 = scalar_select %p27, %s29, %s18
      %p31 = scmp.ge.s32.totalorder %s30, 2
      %s32 = scalar_select %p31, 0, %s30
      %s33 = sadd.s32 1, %s17
      %s34 = scalar_select %p31, %s33, %s17
      %p35 = scmp.ge.s32.totalorder %s34, 2
      %s36 = scalar_select %p35, 0, %s34
      %s37 = sadd.s32 %s18, %s19
      %s38 = sadd.s32 %s32, %s28
      %s39 = ssub.s32 %s17, %s36
      %s40 = ssub.s32 %s37, %s38
      %s41 = sor.u32 %s39, %s40
      %p42 = scmp.eq.s32.totalorder %s41, 0
      %s44 = sadd.s32 %s43, 1
      %s45 = scalar_select %p42, %s43, %s44
      %p48 = pneg %p42
      %p49 = scmp.eq.s32.totalorder %s10, 3
      %p50 = por %p48, %p49
      %p51 = scmp.ne.s32.totalorder %s43, %s46
      %p52 = scmp.eq.s32.totalorder %s10, 0
      %p53 = por %p51, %p52
      %p54 = scmp.ne.s32.totalorder %s43, %s46
      %p55 = scmp.eq.s32.totalorder %s15, 3
      %p56 = por %p54, %p55
      %p57 = scmp.ne.s32.totalorder %s46, %s47
      %p58 = scmp.eq.s32.totalorder %s15, 0
      %p59 = por %p57, %p58
      %p60 = scmp.ne.s32.totalorder %s46, %s47
      %p61 = scmp.eq.s32.totalorder %s16, 3
      %p62 = por %p60, %p61
      %p64 = scmp.ne.s32.totalorder %s47, %s63
      %p65 = scmp.eq.s32.totalorder %s16, 0
      %p66 = por %p64, %p65
      %s67 = sadd.s32 %s18, %s19
      %s68 = sadd.s32 %s32, %s28
      %s69 = ssub.s32 %s17, %s36
      %s70 = ssub.s32 %s67, %s68
      %s71 = sor.u32 %s69, %s70
      %p72 = scmp.eq.s32.totalorder %s71, 0
      %s74 = sadd.s32 %s73, 1
      %s75 = scalar_select %p72, %s73, %s74
      %p78 = pneg %p72
      %p79 = scmp.eq.s32.totalorder %s10, 3
      %p80 = por %p78, %p79
      %p81 = scmp.ne.s32.totalorder %s73, %s76
      %p82 = scmp.eq.s32.totalorder %s10, 0
      %p83 = por %p81, %p82
      %p84 = scmp.ne.s32.totalorder %s73, %s76
      %p85 = scmp.eq.s32.totalorder %s15, 3
      %p86 = por %p84, %p85
      %p87 = scmp.ne.s32.totalorder %s76, %s77
      %p88 = scmp.eq.s32.totalorder %s15, 0
      %p89 = por %p87, %p88
      %p90 = scmp.ne.s32.totalorder %s76, %s77
      %p91 = scmp.eq.s32.totalorder %s16, 3
      %p92 = por %p90, %p91
      %p94 = scmp.ne.s32.totalorder %s77, %s93
      %p95 = scmp.eq.s32.totalorder %s16, 0
      %p96 = por %p94, %p95
      %s97 = ssub.s32 %s17, %s36
      %s98 = ssub.s32 %s18, %s32
      %s99 = sor.u32 %s97, %s98
      %p100 = scmp.eq.s32.totalorder %s99, 0
      %s102 = sadd.s32 %s101, 1
      %s103 = scalar_select %p100, %s101, %s102
      %p106 = pneg %p100
      %p107 = scmp.eq.s32.totalorder %s10, 3
      %p108 = por %p106, %p107
      %p109 = scmp.ne.s32.totalorder %s101, %s104
      %p110 = scmp.eq.s32.totalorder %s10, 0
      %p111 = por %p109, %p110
      %p112 = scmp.ne.s32.totalorder %s101, %s104
      %p113 = scmp.eq.s32.totalorder %s15, 3
      %p114 = por %p112, %p113
      %p115 = scmp.ne.s32.totalorder %s104, %s105
      %p116 = scmp.eq.s32.totalorder %s15, 0
      %p117 = por %p115, %p116
      %p118 = scmp.ne.s32.totalorder %s104, %s105
      %p119 = scmp.eq.s32.totalorder %s16, 3
      %p120 = por %p118, %p119
      %p122 = scmp.ne.s32.totalorder %s105, %s121
      %p123 = scmp.eq.s32.totalorder %s16, 0
      %p124 = por %p122, %p123
      %s125 = ssub.s32 %s17, %s36
      %s126 = ssub.s32 %s18, %s32
      %s127 = sor.u32 %s125, %s126
      %p128 = scmp.eq.s32.totalorder %s127, 0
      %s130 = sadd.s32 %s129, 1
      %s131 = scalar_select %p128, %s129, %s130
      %p134 = pneg %p128
      %p135 = scmp.eq.s32.totalorder %s10, 3
      %p136 = por %p134, %p135
      %p137 = scmp.ne.s32.totalorder %s129, %s132
      %p138 = scmp.eq.s32.totalorder %s10, 0
      %p139 = por %p137, %p138
      %p140 = scmp.ne.s32.totalorder %s129, %s132
      %p141 = scmp.eq.s32.totalorder %s15, 3
      %p142 = por %p140, %p141
      %p143 = scmp.ne.s32.totalorder %s132, %s133
      %p144 = scmp.eq.s32.totalorder %s15, 0
      %p145 = por %p143, %p144
      %p146 = scmp.ne.s32.totalorder %s132, %s133
      %p147 = scmp.eq.s32.totalorder %s16, 3
      %p148 = por %p146, %p147
      %p150 = scmp.ne.s32.totalorder %s133, %s149
      %p151 = scmp.eq.s32.totalorder %s16, 0
      %p152 = por %p150, %p151
      %p153 = scmp.le.s32.totalorder 1, %s10
      %p154 = scmp.lt.s32.totalorder %s10, 5
      %p155 = pnand %p153, %p154
      %p156 = pneg %p155
      // Predicated region
      $region9: #{dice_loss_forward.1} parent=5 // pred_check
        _
      $region10: #{dice_loss_forward.1} parent=5 // pred_check_branch
        %158 = sbr.rel (%p155) target = $region12
      $region11: #{dice_loss_forward.1} parent=5 // pred_region
        %s159 = ssub.s32 %s10, 1
      $region12: #{dice_loss_forward.1} parent=5 // pred_fallthru
        _
      %p160 = scmp.lt.s32.totalorder %s10, 4
      // Predicated region
      $region13: #{dice_loss_forward.1} parent=5 // pred_check
        %p161 = pneg %p160
      $region14: #{dice_loss_forward.1} parent=5 // pred_check_branch
        %163 = sbr.rel (%p161) target = $region16
      $region15: #{dice_loss_forward.1} parent=5 // pred_region
        // Predicated region
        $region17: #{dice_loss_forward.1} parent=15 // pred_check
          %p164 = pneg %p53
        $region18: #{dice_loss_forward.1} parent=15 // pred_check_branch
          %166 = sbr.rel (%p164) target = $region20
        $region19: #{dice_loss_forward.1} parent=15 // pred_region
          %s167 = sand.u32 %s43, 1
          %s168 = sand.u32 %s43, 1
          %s169 = smul.addr %s168, 128
          %s170 = scalar_lea.vmem [#allocation2], %s169
          %s171 = sadd.s32 %s18, %s19
          %s172 = smul.u32 4, %s171
          %s173 = smul.addr %s17, 32
          %s174 = sadd.s32 %s172, %s173
          %s175 = smul.addr %s174, 8
          %s176 = scalar_lea.vmem %s0, %s175
          // Predicated region
          $region21: #{dice_loss_forward.1} parent=19 // pred_check
            _
          $region22: #{dice_loss_forward.1} parent=19 // pred_check_branch
            %178 = sbr.rel (0) target = $region24
          $region23: #{dice_loss_forward.1} parent=19 // pred_region
            // Predicated region
            $region25: #{dice_loss_forward.1} parent=23 // pred_check
              _
            $region26: #{dice_loss_forward.1} parent=23 // pred_check_branch
              %180 = sbr.rel (0) target = $region28
            $region27: #{dice_loss_forward.1} parent=23 // pred_region
              // Predicated region
              $region40: #{dice_loss_forward.1} parent=27 // pred_check
                _
              $region41: #{dice_loss_forward.1} parent=27 // pred_check_branch
                %225 = sbr.rel (0) target = $region43
              $region42: #{dice_loss_forward.1} parent=27 // pred_region
                loop: start=0, step=1, limit=1
                $region44: #{dice_loss_forward.1} parent=42 // loop_pre_header
                  _
                $region45: #{dice_loss_forward.1} parent=42 // loop_header
                  %s227 = sphi 0, %s231
                  %p228 = scmp.ge.s32.totalorder %s227, 1
                  %s232 = sphi %s176, %s176
                  %s233 = sphi %s170, %s170
                $region46: #{dice_loss_forward.1} parent=42 // loop_header_branch
                  %230 = sbr.rel (%p228) target = $region50
                $region47: #{dice_loss_forward.1} parent=42 // loop_body
                  %v234 = vld [vmem:[%s232] sm:$0xff]
                  %235 = vst [vmem:[%s233] sm:$0xff] %v234
                  %v236 = vld [vmem:[%s232 + $0x8] sm:$0xff]
                  %237 = vst [vmem:[%s233 + $0x8] sm:$0xff] %v236
                  %v238 = vld [vmem:[%s232 + $0x10] sm:$0xff]
                  %239 = vst [vmem:[%s233 + $0x10] sm:$0xff] %v238
                  %v240 = vld [vmem:[%s232 + $0x18] sm:$0xff]
                  %241 = vst [vmem:[%s233 + $0x18] sm:$0xff] %v240
                  %v242 = vld [vmem:[%s232 + $0x40] sm:$0xff]
                  %243 = vst [vmem:[%s233 + $0x20] sm:$0xff] %v242
                  %v244 = vld [vmem:[%s232 + $0x48] sm:$0xff]
                  %245 = vst [vmem:[%s233 + $0x28] sm:$0xff] %v244
                  %v246 = vld [vmem:[%s232 + $0x50] sm:$0xff]
                  %247 = vst [vmem:[%s233 + $0x30] sm:$0xff] %v246
                  %v248 = vld [vmem:[%s232 + $0x58] sm:$0xff]
                  %249 = vst [vmem:[%s233 + $0x38] sm:$0xff] %v248
                  %v250 = vld [vmem:[%s232 + $0x80] sm:$0xff]
                  %251 = vst [vmem:[%s233 + $0x40] sm:$0xff] %v250
                  %v252 = vld [vmem:[%s232 + $0x88] sm:$0xff]
                  %253 = vst [vmem:[%s233 + $0x48] sm:$0xff] %v252
                  %v254 = vld [vmem:[%s232 + $0x90] sm:$0xff]
                  %255 = vst [vmem:[%s233 + $0x50] sm:$0xff] %v254
                  %v256 = vld [vmem:[%s232 + $0x98] sm:$0xff]
                  %257 = vst [vmem:[%s233 + $0x58] sm:$0xff] %v256
                  %v258 = vld [vmem:[%s232 + $0xc0] sm:$0xff]
                  %259 = vst [vmem:[%s233 + $0x60] sm:$0xff] %v258
                  %v260 = vld [vmem:[%s232 + $0xc8] sm:$0xff]
                  %261 = vst [vmem:[%s233 + $0x68] sm:$0xff] %v260
                  %v262 = vld [vmem:[%s232 + $0xd0] sm:$0xff]
                  %263 = vst [vmem:[%s233 + $0x70] sm:$0xff] %v262
                  %v264 = vld [vmem:[%s232 + $0xd8] sm:$0xff]
                  %265 = vst [vmem:[%s233 + $0x78] sm:$0xff] %v264
                $region48: #{dice_loss_forward.1} parent=42 // loop_footer
                  %s231 = sadd.s32 1, %s227
                $region49: #{dice_loss_forward.1} parent=42 // loop_footer_branch
                  %226 = sbr.rel target = $region45
                $region50: #{dice_loss_forward.1} parent=42 // loop_exit
                  _
              $region43: #{dice_loss_forward.1} parent=27 // pred_fallthru
                _
              // Predicated region
              $region51: #{dice_loss_forward.1} parent=27 // pred_check
                _
              $region52: #{dice_loss_forward.1} parent=27 // pred_check_branch
                %267 = sbr.rel target = $region54
              $region53: #{dice_loss_forward.1} parent=27 // pred_region
                _
              $region54: #{dice_loss_forward.1} parent=27 // pred_fallthru
                _
            $region28: #{dice_loss_forward.1} parent=23 // pred_fallthru
              _
            // Predicated region
            $region29: #{dice_loss_forward.1} parent=23 // pred_check
              _
            $region30: #{dice_loss_forward.1} parent=23 // pred_check_branch
              %182 = sbr.rel target = $region32
            $region31: #{dice_loss_forward.1} parent=23 // pred_region
              loop: start=0, step=1, limit=1
              $region33: #{dice_loss_forward.1} parent=31 // loop_pre_header
                _
              $region34: #{dice_loss_forward.1} parent=31 // loop_header
                %s185 = sphi 0, %s189
                %p186 = scmp.ge.s32.totalorder %s185, 1
                %s190 = sphi %s176, %s176
                %s191 = sphi %s170, %s170
              $region35: #{dice_loss_forward.1} parent=31 // loop_header_branch
                %188 = sbr.rel (%p186) target = $region39
              $region36: #{dice_loss_forward.1} parent=31 // loop_body
                %v192 = vld [vmem:[%s190] sm:$0xff]
                %193 = vst [vmem:[%s191] sm:$0xff] %v192
                %v194 = vld [vmem:[%s190 + $0x8] sm:$0xff]
                %195 = vst [vmem:[%s191 + $0x8] sm:$0xff] %v194
                %v196 = vld [vmem:[%s190 + $0x10] sm:$0xff]
                %197 = vst [vmem:[%s191 + $0x10] sm:$0xff] %v196
                %v198 = vld [vmem:[%s190 + $0x18] sm:$0xff]
                %199 = vst [vmem:[%s191 + $0x18] sm:$0xff] %v198
                %v200 = vld [vmem:[%s190 + $0x40] sm:$0xff]
                %201 = vst [vmem:[%s191 + $0x20] sm:$0xff] %v200
                %v202 = vld [vmem:[%s190 + $0x48] sm:$0xff]
                %203 = vst [vmem:[%s191 + $0x28] sm:$0xff] %v202
                %v204 = vld [vmem:[%s190 + $0x50] sm:$0xff]
                %205 = vst [vmem:[%s191 + $0x30] sm:$0xff] %v204
                %v206 = vld [vmem:[%s190 + $0x58] sm:$0xff]
                %207 = vst [vmem:[%s191 + $0x38] sm:$0xff] %v206
                %v208 = vld [vmem:[%s190 + $0x80] sm:$0xff]
                %209 = vst [vmem:[%s191 + $0x40] sm:$0xff] %v208
                %v210 = vld [vmem:[%s190 + $0x88] sm:$0xff]
                %211 = vst [vmem:[%s191 + $0x48] sm:$0xff] %v210
                %v212 = vld [vmem:[%s190 + $0x90] sm:$0xff]
                %213 = vst [vmem:[%s191 + $0x50] sm:$0xff] %v212
                %v214 = vld [vmem:[%s190 + $0x98] sm:$0xff]
                %215 = vst [vmem:[%s191 + $0x58] sm:$0xff] %v214
                %v216 = vld [vmem:[%s190 + $0xc0] sm:$0xff]
                %217 = vst [vmem:[%s191 + $0x60] sm:$0xff] %v216
                %v218 = vld [vmem:[%s190 + $0xc8] sm:$0xff]
                %219 = vst [vmem:[%s191 + $0x68] sm:$0xff] %v218
                %v220 = vld [vmem:[%s190 + $0xd0] sm:$0xff]
                %221 = vst [vmem:[%s191 + $0x70] sm:$0xff] %v220
                %v222 = vld [vmem:[%s190 + $0xd8] sm:$0xff]
                %223 = vst [vmem:[%s191 + $0x78] sm:$0xff] %v222
              $region37: #{dice_loss_forward.1} parent=31 // loop_footer
                %s189 = sadd.s32 1, %s185
              $region38: #{dice_loss_forward.1} parent=31 // loop_footer_branch
                %184 = sbr.rel target = $region34
              $region39: #{dice_loss_forward.1} parent=31 // loop_exit
                _
            $region32: #{dice_loss_forward.1} parent=23 // pred_fallthru
              _
          $region24: #{dice_loss_forward.1} parent=19 // pred_fallthru
            _
          %268 = vnop
        $region20: #{dice_loss_forward.1} parent=15 // pred_fallthru
          _
        // Predicated region
        $region55: #{dice_loss_forward.1} parent=15 // pred_check
          %p269 = pneg %p83
        $region56: #{dice_loss_forward.1} parent=15 // pred_check_branch
          %271 = sbr.rel (%p269) target = $region58
        $region57: #{dice_loss_forward.1} parent=15 // pred_region
          %s272 = sadd.s32 %s18, %s19
          %p273 = scmp.lt.s32.totalorder %s17, 1
          %s274 = scalar_select %p273, %s17, 1
          %p275 = scmp.lt.s32.totalorder %s272, 1
          %s276 = scalar_select %p275, %s272, 1
          %s277 = smul.addr %s274, 2
          %s278 = sadd.s32 %s276, %s277
          %s279 = smul.addr %s278, 8
          %s280 = scalar_lea.vmem %s1, %s279
          %s281 = sadd.s32 %s18, %s19
        $region58: #{dice_loss_forward.1} parent=15 // pred_fallthru
          _
      $region16: #{dice_loss_forward.1} parent=5 // pred_fallthru
        _
      %p282 = scmp.le.s32.totalorder 1, %s10
      %p283 = scmp.lt.s32.totalorder %s10, 5
      %p284 = pnand %p282, %p283
      %p285 = pneg %p284
      // Predicated region
      $region59: #{dice_loss_forward.1} parent=5 // pred_check
        _
      $region60: #{dice_loss_forward.1} parent=5 // pred_check_branch
        %287 = sbr.rel (%p284) target = $region62
      $region61: #{dice_loss_forward.1} parent=5 // pred_region
        %s288 = ssub.s32 %s10, 1
        %s289 = sand.u32 %s46, 1
        %s290 = sand.u32 %s46, 1
        %s291 = smul.addr %s290, 128
        %s292 = scalar_lea.vmem [#allocation2], %s291
        // Predicated region
        $region63: #{dice_loss_forward.1} parent=61 // pred_check
          %p293 = pneg %p59
        $region64: #{dice_loss_forward.1} parent=61 // pred_check_branch
          %295 = sbr.rel (%p293) target = $region66
        $region65: #{dice_loss_forward.1} parent=61 // pred_region
          _
        $region66: #{dice_loss_forward.1} parent=61 // pred_fallthru
          _
        %s296 = sand.u32 %s46, 1
        %s297 = sand.u32 %s46, 1
        %s298 = smul.addr %s297, 128
        %s299 = scalar_lea.vmem [#allocation2], %s298
        %p300 = pneg %p59
        %p301 = pneg %p56
        %s302 = sadd.s32 %s21, %s22
        %p303 = scmp.lt.s32.totalorder %s20, 1
        %s304 = scalar_select %p303, %s20, 1
        %p305 = scmp.lt.s32.totalorder %s302, 1
        %s306 = scalar_select %p305, %s302, 1
        %s307 = smul.addr %s304, 2
        %s308 = sadd.s32 %s306, %s307
        %s309 = smul.addr %s308, 8
        %s310 = scalar_lea.vmem %s1, %s309
        %p311 = pneg %p89
        %p312 = pneg %p86
        %p313 = pneg %p117
        %p314 = pneg %p114
        %p315 = scmp.lt.s32.totalorder %s20, 1
        %s316 = scalar_select %p315, %s20, 1
        %p317 = scmp.lt.s32.totalorder %s21, 1
        %s318 = scalar_select %p317, %s21, 1
        %s319 = smul.addr %s318, 4
        %s320 = smul.addr %s316, 8
        %s321 = sadd.s32 %s319, %s320
        %s322 = smul.addr %s321, 8
        %s323 = scalar_lea.vmem %s2, %s322
        %p324 = pneg %p145
        %p325 = pneg %p142
        %p326 = scmp.lt.s32.totalorder %s20, 1
        %s327 = scalar_select %p326, %s20, 1
        %p328 = scmp.lt.s32.totalorder %s21, 1
        %s329 = scalar_select %p328, %s21, 1
        %s330 = smul.addr %s329, 4
        %s331 = smul.addr %s327, 8
        %s332 = sadd.s32 %s330, %s331
        %s333 = smul.addr %s332, 8
        %s334 = scalar_lea.vmem %s3, %s333
        %s335 = sadd.s32 %s21, %s22
        %s336 = smul.u32 4, %s335
        %s337 = sadd.s32 %s21, %s22
        %p338 = scmp.lt.s32.totalorder %s20, 1
        %s339 = scalar_select %p338, %s20, 1
        %p340 = scmp.lt.s32.totalorder %s337, 1
        %s341 = scalar_select %p340, %s337, 1
        %s342 = smul.addr %s339, 2
        %s343 = sadd.s32 %s341, %s342
        %s344 = smul.addr %s343, 8
        %s345 = scalar_lea.vmem %s1, %s344
        %s346 = sadd.s32 %s21, %s22
        %p347 = scmp.lt.s32.totalorder %s20, 1
        %s348 = scalar_select %p347, %s20, 1
        %p349 = scmp.lt.s32.totalorder %s21, 1
        %s350 = scalar_select %p349, %s21, 1
        %s351 = smul.addr %s350, 4
        %s352 = smul.addr %s348, 8
        %s353 = sadd.s32 %s351, %s352
        %s354 = smul.addr %s353, 8
        %s355 = scalar_lea.vmem %s2, %s354
        %p356 = scmp.lt.s32.totalorder %s20, 1
        %s357 = scalar_select %p356, %s20, 1
        %p358 = scmp.lt.s32.totalorder %s21, 1
        %s359 = scalar_select %p358, %s21, 1
        %s360 = smul.addr %s359, 4
        %s361 = smul.addr %s357, 8
        %s362 = sadd.s32 %s360, %s361
        %s363 = smul.addr %s362, 8
        %s364 = scalar_lea.vmem %s3, %s363
        %p365 = scmp.eq.s32.totalorder %s22, 0
        // Predicated region
        $region67: #{dice_loss_forward.1} parent=61 // pred_check
          %p366 = pneg %p365
        $region68: #{dice_loss_forward.1} parent=61 // pred_check_branch
          %368 = sbr.rel (%p366) target = $region70
        $region69: #{dice_loss_forward.1} parent=61 // pred_region
          %369 = vst [vmem:[%s355] sm:$0xff] 0.0
          %370 = vst [vmem:[%s355 + $0x8] sm:$0xff] 0.0
          %371 = vst [vmem:[%s355 + $0x10] sm:$0xff] 0.0
          %372 = vst [vmem:[%s355 + $0x18] sm:$0xff] 0.0
          %373 = vst [vmem:[%s364] sm:$0xff] 0.0
          %374 = vst [vmem:[%s364 + $0x8] sm:$0xff] 0.0
          %375 = vst [vmem:[%s364 + $0x10] sm:$0xff] 0.0
          %376 = vst [vmem:[%s364 + $0x18] sm:$0xff] 0.0
        $region70: #{dice_loss_forward.1} parent=61 // pred_fallthru
          _
        %v377 = vld [vmem:[%s292] sm:$0xff]
        %v378 = vld [vmem:[%s292 + $0x8] sm:$0xff]
        %v379 = vld [vmem:[%s292 + $0x10] sm:$0xff]
        %v380 = vld [vmem:[%s292 + $0x18] sm:$0xff]
        %v381 = vld [vmem:[%s345] sm:$0xff]
        %v382 = vunpack.c.0.s8 %v381
        %v383 = vunpack.c.1.s8 %v381
        %v384 = vunpack.c.2.s8 %v381
        %v385 = vunpack.c.3.s8 %v381
        %v386 = vmul.f32 %v377, 0.5
        %v387 = vmul.f32 %v378, 0.5
        %v388 = vmul.f32 %v379, 0.5
        %v389 = vmul.f32 %v380, 0.5
        %v390 = vtanh.pop %v386
        %v391 = vtanh.pop %v387
        %v392 = vtanh.pop %v388
        %v393 = vtanh.pop %v389
        %v394 = vmul.f32 %v390, 0.5
        %v395 = vmul.f32 %v391, 0.5
        %v396 = vmul.f32 %v392, 0.5
        %v397 = vmul.f32 %v393, 0.5
        %v398 = vadd.f32 %v394, 0.5
        %v399 = vadd.f32 %v395, 0.5
        %v400 = vadd.f32 %v396, 0.5
        %v401 = vadd.f32 %v397, 0.5
        %vm402 = vcmp.eq.s32.totalorder %v382, 0
        %vm403 = vcmp.eq.s32.totalorder %v383, 0
        %vm404 = vcmp.eq.s32.totalorder %v384, 0
        %vm405 = vcmp.eq.s32.totalorder %v385, 0
        %v406 = vmul.f32 %v398, %v398
        %v407 = vmul.f32 %v399, %v399
        %v408 = vmul.f32 %v400, %v400
        %v409 = vmul.f32 %v401, %v401
        %v410 = vsel %vm402, %v398, 0.0
        %v411 = vsel %vm403, %v399, 0.0
        %v412 = vsel %vm404, %v400, 0.0
        %v413 = vsel %vm405, %v401, 0.0
        %v414 = vadd.f32 %v406, 1.0
        %v415 = vadd.f32 %v407, 1.0
        %v416 = vadd.f32 %v408, 1.0
        %v417 = vadd.f32 %v409, 1.0
        %v418 = vsel %vm402, %v414, %v406
        %v419 = vsel %vm403, %v415, %v407
        %v420 = vsel %vm404, %v416, %v408
        %v421 = vsel %vm405, %v417, %v409
        %v422 = vadd.f32 %v410, %v411
        %v423 = vadd.f32 %v422, %v412
        %v424 = vadd.f32 %v423, %v413
        %v425 = vadd.f32 %v424, 0.0
        %v426 = vadd.f32 %v418, %v419
        %v427 = vadd.f32 %v426, %v420
        %v428 = vadd.f32 %v427, %v421
        %v429 = vadd.f32 %v428, 0.0
        %v430 = vld [vmem:[%s355] sm:$0xff]
        %v431 = vadd.f32 %v430, %v425
        %432 = vst [vmem:[%s355] sm:$0xff] %v431
        %v433 = vld [vmem:[%s364] sm:$0xff]
        %v434 = vadd.f32 %v433, %v429
        %435 = vst [vmem:[%s364] sm:$0xff] %v434
        %s436 = sadd.s32 0, 32
        %s437 = scalar_lea.vmem %s292, %s436 [#allocation2]
        %v438 = vld [vmem:[%s437] sm:$0xff]
        %v439 = vld [vmem:[%s437 + $0x8] sm:$0xff]
        %v440 = vld [vmem:[%s437 + $0x10] sm:$0xff]
        %v441 = vld [vmem:[%s437 + $0x18] sm:$0xff]
        %v442 = vld [vmem:[%s345] sm:$0xff]
        %v443 = vunpack.c.0.s8 %v442
        %v444 = vunpack.c.1.s8 %v442
        %v445 = vunpack.c.2.s8 %v442
        %v446 = vunpack.c.3.s8 %v442
        %v447 = vmul.f32 %v438, 0.5
        %v448 = vmul.f32 %v439, 0.5
        %v449 = vmul.f32 %v440, 0.5
        %v450 = vmul.f32 %v441, 0.5
        %v451 = vtanh.pop %v447
        %v452 = vtanh.pop %v448
        %v453 = vtanh.pop %v449
        %v454 = vtanh.pop %v450
        %v455 = vmul.f32 %v451, 0.5
        %v456 = vmul.f32 %v452, 0.5
        %v457 = vmul.f32 %v453, 0.5
        %v458 = vmul.f32 %v454, 0.5
        %v459 = vadd.f32 %v455, 0.5
        %v460 = vadd.f32 %v456, 0.5
        %v461 = vadd.f32 %v457, 0.5
        %v462 = vadd.f32 %v458, 0.5
        %vm463 = vcmp.eq.s32.totalorder %v443, 1
        %vm464 = vcmp.eq.s32.totalorder %v444, 1
        %vm465 = vcmp.eq.s32.totalorder %v445, 1
        %vm466 = vcmp.eq.s32.totalorder %v446, 1
        %v467 = vmul.f32 %v459, %v459
        %v468 = vmul.f32 %v460, %v460
        %v469 = vmul.f32 %v461, %v461
        %v470 = vmul.f32 %v462, %v462
        %v471 = vsel %vm463, %v459, 0.0
        %v472 = vsel %vm464, %v460, 0.0
        %v473 = vsel %vm465, %v461, 0.0
        %v474 = vsel %vm466, %v462, 0.0
        %v475 = vadd.f32 %v467, 1.0
        %v476 = vadd.f32 %v468, 1.0
        %v477 = vadd.f32 %v469, 1.0
        %v478 = vadd.f32 %v470, 1.0
        %v479 = vsel %vm463, %v475, %v467
        %v480 = vsel %vm464, %v476, %v468
        %v481 = vsel %vm465, %v477, %v469
        %v482 = vsel %vm466, %v478, %v470
        %v483 = vadd.f32 %v471, %v472
        %v484 = vadd.f32 %v483, %v473
        %v485 = vadd.f32 %v484, %v474
        %v486 = vadd.f32 %v485, 0.0
        %v487 = vadd.f32 %v479, %v480
        %v488 = vadd.f32 %v487, %v481
        %v489 = vadd.f32 %v488, %v482
        %v490 = vadd.f32 %v489, 0.0
        %s491 = scalar_lea.vmem %s355, 8
        %v492 = vld [vmem:[%s491] sm:$0xff]
        %v493 = vadd.f32 %v492, %v486
        %494 = vst [vmem:[%s491] sm:$0xff] %v493
        %s495 = scalar_lea.vmem %s364, 8
        %v496 = vld [vmem:[%s495] sm:$0xff]
        %v497 = vadd.f32 %v496, %v490
        %498 = vst [vmem:[%s495] sm:$0xff] %v497
        %s499 = sadd.s32 0, 64
        %s500 = scalar_lea.vmem %s292, %s499 [#allocation2]
        %v501 = vld [vmem:[%s500] sm:$0xff]
        %v502 = vld [vmem:[%s500 + $0x8] sm:$0xff]
        %v503 = vld [vmem:[%s500 + $0x10] sm:$0xff]
        %v504 = vld [vmem:[%s500 + $0x18] sm:$0xff]
        %v505 = vld [vmem:[%s345] sm:$0xff]
        %v506 = vunpack.c.0.s8 %v505
        %v507 = vunpack.c.1.s8 %v505
        %v508 = vunpack.c.2.s8 %v505
        %v509 = vunpack.c.3.s8 %v505
        %v510 = vmul.f32 %v501, 0.5
        %v511 = vmul.f32 %v502, 0.5
        %v512 = vmul.f32 %v503, 0.5
        %v513 = vmul.f32 %v504, 0.5
        %v514 = vtanh.pop %v510
        %v515 = vtanh.pop %v511
        %v516 = vtanh.pop %v512
        %v517 = vtanh.pop %v513
        %v518 = vmul.f32 %v514, 0.5
        %v519 = vmul.f32 %v515, 0.5
        %v520 = vmul.f32 %v516, 0.5
        %v521 = vmul.f32 %v517, 0.5
        %v522 = vadd.f32 %v518, 0.5
        %v523 = vadd.f32 %v519, 0.5
        %v524 = vadd.f32 %v520, 0.5
        %v525 = vadd.f32 %v521, 0.5
        %vm526 = vcmp.eq.s32.totalorder %v506, 2
        %vm527 = vcmp.eq.s32.totalorder %v507, 2
        %vm528 = vcmp.eq.s32.totalorder %v508, 2
        %vm529 = vcmp.eq.s32.totalorder %v509, 2
        %v530 = vmul.f32 %v522, %v522
        %v531 = vmul.f32 %v523, %v523
        %v532 = vmul.f32 %v524, %v524
        %v533 = vmul.f32 %v525, %v525
        %v534 = vsel %vm526, %v522, 0.0
        %v535 = vsel %vm527, %v523, 0.0
        %v536 = vsel %vm528, %v524, 0.0
        %v537 = vsel %vm529, %v525, 0.0
        %v538 = vadd.f32 %v530, 1.0
        %v539 = vadd.f32 %v531, 1.0
        %v540 = vadd.f32 %v532, 1.0
        %v541 = vadd.f32 %v533, 1.0
        %v542 = vsel %vm526, %v538, %v530
        %v543 = vsel %vm527, %v539, %v531
        %v544 = vsel %vm528, %v540, %v532
        %v545 = vsel %vm529, %v541, %v533
        %v546 = vadd.f32 %v534, %v535
        %v547 = vadd.f32 %v546, %v536
        %v548 = vadd.f32 %v547, %v537
        %v549 = vadd.f32 %v548, 0.0
        %v550 = vadd.f32 %v542, %v543
        %v551 = vadd.f32 %v550, %v544
        %v552 = vadd.f32 %v551, %v545
        %v553 = vadd.f32 %v552, 0.0
        %s554 = scalar_lea.vmem %s355, 16
        %v555 = vld [vmem:[%s554] sm:$0xff]
        %v556 = vadd.f32 %v555, %v549
        %557 = vst [vmem:[%s554] sm:$0xff] %v556
        %s558 = scalar_lea.vmem %s364, 16
        %v559 = vld [vmem:[%s558] sm:$0xff]
        %v560 = vadd.f32 %v559, %v553
        %561 = vst [vmem:[%s558] sm:$0xff] %v560
        %s562 = sadd.s32 0, 96
        %s563 = scalar_lea.vmem %s292, %s562 [#allocation2]
        %v564 = vld [vmem:[%s563] sm:$0xff]
        %v565 = vld [vmem:[%s563 + $0x8] sm:$0xff]
        %v566 = vld [vmem:[%s563 + $0x10] sm:$0xff]
        %v567 = vld [vmem:[%s563 + $0x18] sm:$0xff]
        %v568 = vld [vmem:[%s345] sm:$0xff]
        %v569 = vunpack.c.0.s8 %v568
        %v570 = vunpack.c.1.s8 %v568
        %v571 = vunpack.c.2.s8 %v568
        %v572 = vunpack.c.3.s8 %v568
        %v573 = vmul.f32 %v564, 0.5
        %v574 = vmul.f32 %v565, 0.5
        %v575 = vmul.f32 %v566, 0.5
        %v576 = vmul.f32 %v567, 0.5
        %v577 = vtanh.pop %v573
        %v578 = vtanh.pop %v574
        %v579 = vtanh.pop %v575
        %v580 = vtanh.pop %v576
        %v581 = vmul.f32 %v577, 0.5
        %v582 = vmul.f32 %v578, 0.5
        %v583 = vmul.f32 %v579, 0.5
        %v584 = vmul.f32 %v580, 0.5
        %v585 = vadd.f32 %v581, 0.5
        %v586 = vadd.f32 %v582, 0.5
        %v587 = vadd.f32 %v583, 0.5
        %v588 = vadd.f32 %v584, 0.5
        %vm589 = vcmp.eq.s32.totalorder %v569, 3
        %vm590 = vcmp.eq.s32.totalorder %v570, 3
        %vm591 = vcmp.eq.s32.totalorder %v571, 3
        %vm592 = vcmp.eq.s32.totalorder %v572, 3
        %v593 = vmul.f32 %v585, %v585
        %v594 = vmul.f32 %v586, %v586
        %v595 = vmul.f32 %v587, %v587
        %v596 = vmul.f32 %v588, %v588
        %v597 = vsel %vm589, %v585, 0.0
        %v598 = vsel %vm590, %v586, 0.0
        %v599 = vsel %vm591, %v587, 0.0
        %v600 = vsel %vm592, %v588, 0.0
        %v601 = vadd.f32 %v593, 1.0
        %v602 = vadd.f32 %v594, 1.0
        %v603 = vadd.f32 %v595, 1.0
        %v604 = vadd.f32 %v596, 1.0
        %v605 = vsel %vm589, %v601, %v593
        %v606 = vsel %vm590, %v602, %v594
        %v607 = vsel %vm591, %v603, %v595
        %v608 = vsel %vm592, %v604, %v596
        %v609 = vadd.f32 %v597, %v598
        %v610 = vadd.f32 %v609, %v599
        %v611 = vadd.f32 %v610, %v600
        %v612 = vadd.f32 %v611, 0.0
        %v613 = vadd.f32 %v605, %v606
        %v614 = vadd.f32 %v613, %v607
        %v615 = vadd.f32 %v614, %v608
        %v616 = vadd.f32 %v615, 0.0
        %s617 = scalar_lea.vmem %s355, 24
        %v618 = vld [vmem:[%s617] sm:$0xff]
        %v619 = vadd.f32 %v618, %v612
        %620 = vst [vmem:[%s617] sm:$0xff] %v619
        %s621 = scalar_lea.vmem %s364, 24
        %v622 = vld [vmem:[%s621] sm:$0xff]
        %v623 = vadd.f32 %v622, %v616
        %624 = vst [vmem:[%s621] sm:$0xff] %v623
        %p625 = scmp.lt.s32.totalorder %s20, 1
        %s626 = scalar_select %p625, %s20, 1
        %p627 = scmp.lt.s32.totalorder %s21, 1
        %s628 = scalar_select %p627, %s21, 1
        %s629 = smul.addr %s628, 4
        %s630 = smul.addr %s626, 8
        %s631 = sadd.s32 %s629, %s630
        %s632 = smul.addr %s631, 8
        %s633 = scalar_lea.vmem %s2, %s632
        %p634 = scmp.lt.s32.totalorder %s20, 1
        %s635 = scalar_select %p634, %s20, 1
        %p636 = scmp.lt.s32.totalorder %s21, 1
        %s637 = scalar_select %p636, %s21, 1
        %s638 = smul.addr %s637, 4
        %s639 = smul.addr %s635, 8
        %s640 = sadd.s32 %s638, %s639
        %s641 = smul.addr %s640, 8
        %s642 = scalar_lea.vmem %s3, %s641
        // Predicated region
        $region71: #{dice_loss_forward.1} parent=61 // pred_check
          %p643 = pneg %p114
        $region72: #{dice_loss_forward.1} parent=61 // pred_check_branch
          %645 = sbr.rel (%p643) target = $region74
        $region73: #{dice_loss_forward.1} parent=61 // pred_region
          _
        $region74: #{dice_loss_forward.1} parent=61 // pred_fallthru
          _
        // Predicated region
        $region75: #{dice_loss_forward.1} parent=61 // pred_check
          %p646 = pneg %p142
        $region76: #{dice_loss_forward.1} parent=61 // pred_check_branch
          %648 = sbr.rel (%p646) target = $region78
        $region77: #{dice_loss_forward.1} parent=61 // pred_region
          _
        $region78: #{dice_loss_forward.1} parent=61 // pred_fallthru
          _
      $region62: #{dice_loss_forward.1} parent=5 // pred_fallthru
        _
      %p649 = scmp.le.s32.totalorder 2, %s10
      // Predicated region
      $region79: #{dice_loss_forward.1} parent=5 // pred_check
        %p650 = pneg %p649
      $region80: #{dice_loss_forward.1} parent=5 // pred_check_branch
        %652 = sbr.rel (%p650) target = $region82
      $region81: #{dice_loss_forward.1} parent=5 // pred_region
        %s653 = ssub.s32 %s10, 2
        // Predicated region
        $region83: #{dice_loss_forward.1} parent=81 // pred_check
          %p654 = pneg %p120
        $region84: #{dice_loss_forward.1} parent=81 // pred_check_branch
          %656 = sbr.rel (%p654) target = $region86
        $region85: #{dice_loss_forward.1} parent=81 // pred_region
          %p657 = scmp.lt.s32.totalorder %s23, 1
          %s658 = scalar_select %p657, %s23, 1
          %p659 = scmp.lt.s32.totalorder %s24, 1
          %s660 = scalar_select %p659, %s24, 1
          %s661 = smul.addr %s660, 4
          %s662 = smul.addr %s658, 8
          %s663 = sadd.s32 %s661, %s662
          %s664 = smul.addr %s663, 8
          %s665 = scalar_lea.vmem %s2, %s664
        $region86: #{dice_loss_forward.1} parent=81 // pred_fallthru
          _
        // Predicated region
        $region87: #{dice_loss_forward.1} parent=81 // pred_check
          %p666 = pneg %p148
        $region88: #{dice_loss_forward.1} parent=81 // pred_check_branch
          %668 = sbr.rel (%p666) target = $region90
        $region89: #{dice_loss_forward.1} parent=81 // pred_region
          %p669 = scmp.lt.s32.totalorder %s23, 1
          %s670 = scalar_select %p669, %s23, 1
          %p671 = scmp.lt.s32.totalorder %s24, 1
          %s672 = scalar_select %p671, %s24, 1
          %s673 = smul.addr %s672, 4
          %s674 = smul.addr %s670, 8
          %s675 = sadd.s32 %s673, %s674
          %s676 = smul.addr %s675, 8
          %s677 = scalar_lea.vmem %s3, %s676
        $region90: #{dice_loss_forward.1} parent=81 // pred_fallthru
          _
      $region82: #{dice_loss_forward.1} parent=5 // pred_fallthru
        _
    $region6: #{dice_loss_forward.1} parent=1 // loop_footer
      %s14 = sadd.s32 1, %s10
    $region7: #{dice_loss_forward.1} parent=1 // loop_footer_branch
      %9 = sbr.rel target = $region3
    $region8: #{dice_loss_forward.1} parent=1 // loop_exit
      _

</llo_original>
